<compile_context>
chip_gen: v7x
topology: tpu7x:2x2x1
jax: 0.10.0
libtpu: 0.0.40
codegen_flags: <defaults>
</compile_context>

<pallas_src>
import math

import jax
import jax.numpy as jnp
from jax.experimental import pallas as pl
from jax.experimental.pallas import tpu as pltpu


_TWO_PI = 2.0 * math.pi
_HALF_PI = 0.5 * math.pi


def _round_up(a: int, b: int) -> int:
    return (a + b - 1) // b * b


def _gfp_kernel(x_ref, w_ref, ph_ref, out_ref, ang_ref):
    # x_ref: (TB, r) f32; w_ref/ph_ref: (1, ED) f32 resident;
    # out_ref: (TB, r*ED); ang_ref: (TB, r*ED) f32 VMEM scratch.
    r = x_ref.shape[1]
    ed = w_ref.shape[1]
    x = x_ref[...]            # (TB, r)
    w = w_ref[...]            # (1, ED): [2*pi*W, 2*pi*W] folded in the wrapper
    ph = ph_ref[...]          # (1, ED): [0]*H ++ [pi/2]*H  (cos = sin(t+pi/2))
    if r == 1:
        # Already lane-dense: single dense sin + dense store, no scratch.
        out_ref[...] = jnp.sin(x * w + ph).astype(out_ref.dtype)
    else:
        # Assemble a lane-dense angle tile with r cheap broadcast-mul-adds,
        # then run ONE dense sin over the whole (TB, r*ED) tile.
        for j in range(r):                           # static unroll, r <= 16
            ang_ref[:, j * ed:(j + 1) * ed] = x[:, j:j + 1] * w + ph
        out_ref[...] = jnp.sin(ang_ref[...]).astype(out_ref.dtype)


def _gfp_xla(x, W):
    proj = x[:, None].astype(jnp.float32) * W[None, :].astype(jnp.float32) * _TWO_PI
    return jnp.concatenate([jnp.sin(proj), jnp.cos(proj)], axis=-1)


def gaussian_fourier_projection(x, W, *, out_dtype=jnp.float32,
                                min_pallas_elements=32768,
                                max_block_rows=1024,
                                min_grid_steps=4):
    """x: (B,) timesteps; W: (embed_dim//2,) fixed gaussian weights.

    Returns (B, embed_dim) = concat([sin(x*W*2pi), cos(x*W*2pi)], axis=-1),
    matching the PyTorch module.
    """
    B = x.shape[0]
    half = W.shape[0]
    embed_dim = 2 * half

    # Tiny problems: pallas_call launch/DMA overhead dominates -> let XLA fuse.
    if B * embed_dim < min_pallas_elements:
        return _gfp_xla(x, W).astype(out_dtype)

    # Packing factor: r batch rows per packed output row so the output's last
    # dim is a multiple of 128 lanes (dense, unmasked HBM writeback).
    r = 128 // math.gcd(embed_dim, 128)
    if r > 16:          # pathological tiny embed_dim; stay correct, skip packing
        r = 1
    packed_w = r * embed_dim

    Bp = pl.cdiv(B, r)                               # packed rows needed

    # Block rows: keep each output block <= ~3 MiB, then rebalance so padding
    # stays small and the grid has >= min_grid_steps "parallel" steps when the
    # batch allows (v7x: both TensorCores used; writeback overlaps compute).
    row_bytes = packed_w * 4
    rows_by_vmem = max(8, ((3 << 20) // row_bytes) // 8 * 8)
    tb_cap = min(max_block_rows, rows_by_vmem)
    steps = max(pl.cdiv(Bp, tb_cap),                  # VMEM-imposed minimum
                min(min_grid_steps, pl.cdiv(Bp, 8)),  # multi-step when possible
                1)
    tb = _round_up(pl.cdiv(Bp, steps), 8)
    Bp_pad = _round_up(Bp, tb)
    B_pad = Bp_pad * r

    x_pad = x.astype(jnp.float32)
    if B_pad != B:
        x_pad = jnp.pad(x_pad, (0, B_pad - B))       # padded rows sliced off below
    x_packed = x_pad.reshape(Bp_pad, r)

    # Constants folded once in the wrapper (tiny resident tiles):
    #   w_row  = [2*pi*W, 2*pi*W]          (sin lanes | cos lanes)
    #   ph_row = [0,...,0, pi/2,...,pi/2]  (cos(t) = sin(t + pi/2))
    w2 = W.astype(jnp.float32) * _TWO_PI
    w_row = jnp.concatenate([w2, w2]).reshape(1, embed_dim)
    ph_row = jnp.concatenate(
        [jnp.zeros((half,), jnp.float32),
         jnp.full((half,), _HALF_PI, jnp.float32)]).reshape(1, embed_dim)

    out_packed = pl.pallas_call(
        _gfp_kernel,
        out_shape=jax.ShapeDtypeStruct((Bp_pad, packed_w), out_dtype),
        grid_spec=pltpu.PrefetchScalarGridSpec(
            num_scalar_prefetch=0,
            grid=(Bp_pad // tb,),
            in_specs=[
                pl.BlockSpec((tb, r), lambda i: (i, 0)),
                pl.BlockSpec((1, embed_dim), lambda i: (0, 0)),   # resident W row
                pl.BlockSpec((1, embed_dim), lambda i: (0, 0)),   # resident phase
            ],
            out_specs=pl.BlockSpec((tb, packed_w), lambda i: (i, 0)),
            scratch_shapes=[pltpu.VMEM((tb, packed_w), jnp.float32)],
        ),
        compiler_params=pltpu.CompilerParams(
            dimension_semantics=("parallel",)),      # v7x: shard over both TCs
    )(x_packed, w_row, ph_row)

    # Free contiguous reshape back to the PyTorch layout; drop padded rows.
    out = out_packed.reshape(B_pad, embed_dim)
    return out[:B] if B_pad != B else out


if __name__ == "__main__":
    key = jax.random.PRNGKey(0)

    def check(batch, embed_dim, k, scale=30.0):
        k_w, k_x = jax.random.split(k)
        # Mirrors torch.randn(embed_dim//2) * scale (fixed, non-trainable).
        W = jax.random.normal(k_w, (embed_dim // 2,), dtype=jnp.float32) * scale
        x = jax.random.uniform(k_x, (batch,), dtype=jnp.float32)

        # Force the Pallas path even at tiny sizes so the kernel is exercised.
        out = gaussian_fourier_projection(x, W, min_pallas_elements=0)
        out = jax.block_until_ready(out)

        # Reference in the PyTorch op order: ((x*W)*2)*pi.
        proj = x[:, None] * W[None, :] * 2.0 * math.pi
        ref = jnp.concatenate([jnp.sin(proj), jnp.cos(proj)], axis=-1)
        assert out.shape == (batch, embed_dim), out.shape
        # |x*W*2pi| can reach O(100) in fp32; one ulp of the angle there (plus
        # the pi/2 phase fold for cos) is ~1e-4, so allow a few e-4 of
        # absolute slack on the bounded output.
        assert jnp.allclose(out, ref, atol=5e-4, rtol=1e-4), \
            float(jnp.max(jnp.abs(out - ref)))

    keys = jax.random.split(key, 4)
    check(8, 32, keys[0])      # spec-sized example: r=4 packing, grid=1
    check(1000, 32, keys[1])   # ragged batch -> rebalanced tb + trailing slice
    check(4096, 64, keys[2])   # r=2 packing, multi-step parallel grid
    check(256, 128, keys[3])   # r=1 path: already lane-dense, no scratch loop

    print("KERNEL_OK")
</pallas_src>

<mosaic_0001>
module attributes {stable_mosaic.version = 11 : i64} {
  func.func @_gfp_kernel(%arg0: i32, %arg1: memref<8x4xf32, #tpu.memory_space<vmem>>, %arg2: memref<1x32xf32, #tpu.memory_space<vmem>>, %arg3: memref<1x32xf32, #tpu.memory_space<vmem>>, %arg4: memref<8x128xf32, #tpu.memory_space<vmem>>, %arg5: memref<8x128xf32, #tpu.memory_space<vmem>>) attributes {dimension_semantics = [#tpu.dimension_semantics<parallel>], iteration_bounds = array<i64: 1>, scalar_prefetch = 0 : i64, scratch_operands = 1 : i64, tpu.core_type = #tpu.core_type<tc>, window_params = [{transform_indices = @transform_0, window_bounds = array<i64: 8, 4>}, {pipeline_mode = #tpu.pipeline_mode<synchronous>, transform_indices = @transform_1, window_bounds = array<i64: 1, 32>}, {pipeline_mode = #tpu.pipeline_mode<synchronous>, transform_indices = @transform_2, window_bounds = array<i64: 1, 32>}, {transform_indices = @transform_3, window_bounds = array<i64: 8, 128>}]} {
    %c0 = arith.constant 0 : index
    %c0_0 = arith.constant 0 : index
    %0 = vector.load %arg1[%c0, %c0_0] : memref<8x4xf32, #tpu.memory_space<vmem>>, vector<8x4xf32>
    %c0_1 = arith.constant 0 : index
    %c0_2 = arith.constant 0 : index
    %1 = vector.load %arg2[%c0_1, %c0_2] : memref<1x32xf32, #tpu.memory_space<vmem>>, vector<1x32xf32>
    %c0_3 = arith.constant 0 : index
    %c0_4 = arith.constant 0 : index
    %2 = vector.load %arg3[%c0_3, %c0_4] : memref<1x32xf32, #tpu.memory_space<vmem>>, vector<1x32xf32>
    %3 = vector.extract_strided_slice %0 {offsets = [0, 0], sizes = [8, 1], strides = [1, 1]} : vector<8x4xf32> to vector<8x1xf32>
    %4 = vector.broadcast %3 : vector<8x1xf32> to vector<8x32xf32>
    %5 = vector.broadcast %1 : vector<1x32xf32> to vector<8x32xf32>
    %6 = arith.mulf %4, %5 : vector<8x32xf32>
    %7 = vector.broadcast %2 : vector<1x32xf32> to vector<8x32xf32>
    %8 = arith.addf %6, %7 : vector<8x32xf32>
    %c0_5 = arith.constant 0 : index
    %c0_6 = arith.constant 0 : index
    %9 = vector.load %arg5[%c0_5, %c0_6] : memref<8x128xf32, #tpu.memory_space<vmem>>, vector<8x32xf32>
    tpu.vector_store %arg5[%c0_5, %c0_6], %8 {strides = array<i32>} : memref<8x128xf32, #tpu.memory_space<vmem>>, vector<8x32xf32>,
    %10 = vector.extract_strided_slice %0 {offsets = [0, 1], sizes = [8, 1], strides = [1, 1]} : vector<8x4xf32> to vector<8x1xf32>
    %11 = vector.broadcast %10 : vector<8x1xf32> to vector<8x32xf32>
    %12 = vector.broadcast %1 : vector<1x32xf32> to vector<8x32xf32>
    %13 = arith.mulf %11, %12 : vector<8x32xf32>
    %14 = vector.broadcast %2 : vector<1x32xf32> to vector<8x32xf32>
    %15 = arith.addf %13, %14 : vector<8x32xf32>
    %c0_7 = arith.constant 0 : index
    %c32 = arith.constant 32 : index
    %16 = vector.load %arg5[%c0_7, %c32] : memref<8x128xf32, #tpu.memory_space<vmem>>, vector<8x32xf32>
    tpu.vector_store %arg5[%c0_7, %c32], %15 {strides = array<i32>} : memref<8x128xf32, #tpu.memory_space<vmem>>, vector<8x32xf32>,
    %17 = vector.extract_strided_slice %0 {offsets = [0, 2], sizes = [8, 1], strides = [1, 1]} : vector<8x4xf32> to vector<8x1xf32>
    %18 = vector.broadcast %17 : vector<8x1xf32> to vector<8x32xf32>
    %19 = vector.broadcast %1 : vector<1x32xf32> to vector<8x32xf32>
    %20 = arith.mulf %18, %19 : vector<8x32xf32>
    %21 = vector.broadcast %2 : vector<1x32xf32> to vector<8x32xf32>
    %22 = arith.addf %20, %21 : vector<8x32xf32>
    %c0_8 = arith.constant 0 : index
    %c64 = arith.constant 64 : index
    %23 = vector.load %arg5[%c0_8, %c64] : memref<8x128xf32, #tpu.memory_space<vmem>>, vector<8x32xf32>
    tpu.vector_store %arg5[%c0_8, %c64], %22 {strides = array<i32>} : memref<8x128xf32, #tpu.memory_space<vmem>>, vector<8x32xf32>,
    %24 = vector.extract_strided_slice %0 {offsets = [0, 3], sizes = [8, 1], strides = [1, 1]} : vector<8x4xf32> to vector<8x1xf32>
    %25 = vector.broadcast %24 : vector<8x1xf32> to vector<8x32xf32>
    %26 = vector.broadcast %1 : vector<1x32xf32> to vector<8x32xf32>
    %27 = arith.mulf %25, %26 : vector<8x32xf32>
    %28 = vector.broadcast %2 : vector<1x32xf32> to vector<8x32xf32>
    %29 = arith.addf %27, %28 : vector<8x32xf32>
    %c0_9 = arith.constant 0 : index
    %c96 = arith.constant 96 : index
    %30 = vector.load %arg5[%c0_9, %c96] : memref<8x128xf32, #tpu.memory_space<vmem>>, vector<8x32xf32>
    tpu.vector_store %arg5[%c0_9, %c96], %29 {strides = array<i32>} : memref<8x128xf32, #tpu.memory_space<vmem>>, vector<8x32xf32>,
    %c0_10 = arith.constant 0 : index
    %c0_11 = arith.constant 0 : index
    %31 = vector.load %arg5[%c0_10, %c0_11] : memref<8x128xf32, #tpu.memory_space<vmem>>, vector<8x128xf32>
    %32 = math.sin %31 : vector<8x128xf32>
    %c0_12 = arith.constant 0 : index
    %c0_13 = arith.constant 0 : index
    %33 = vector.load %arg4[%c0_12, %c0_13] : memref<8x128xf32, #tpu.memory_space<vmem>>, vector<8x128xf32>
    tpu.vector_store %arg4[%c0_12, %c0_13], %32 {strides = array<i32>} : memref<8x128xf32, #tpu.memory_space<vmem>>, vector<8x128xf32>,
    return
  }
  func.func @transform_0(%arg0: i32) -> (i32, i32) {
    %c0_i32 = arith.constant 0 : i32
    %c0_i32_0 = arith.constant 0 : i32
    return %arg0, %c0_i32 : i32, i32
  }
  func.func @transform_1(%arg0: i32) -> (i32, i32) {
    %c0_i32 = arith.constant 0 : i32
    %c0_i32_0 = arith.constant 0 : i32
    %c0_i32_1 = arith.constant 0 : i32
    return %c0_i32, %c0_i32_0 : i32, i32
  }
  func.func @transform_2(%arg0: i32) -> (i32, i32) {
    %c0_i32 = arith.constant 0 : i32
    %c0_i32_0 = arith.constant 0 : i32
    %c0_i32_1 = arith.constant 0 : i32
    return %c0_i32, %c0_i32_0 : i32, i32
  }
  func.func @transform_3(%arg0: i32) -> (i32, i32) {
    %c0_i32 = arith.constant 0 : i32
    %c0_i32_0 = arith.constant 0 : i32
    return %arg0, %c0_i32 : i32, i32
  }
}

</mosaic_0001>

<llo_original>
// kernel: tpu_custom_call.1
$region0: #{tpu_custom_call.1}
  #allocation0 [shape = 'u32[]', space=smem, size = 0x4, offset = 0x4, fixed_abs, tag = 'smem constant byte address 0x4 - core index']
  #allocation1 [shape = 'u32[144,128]{1,0:T(1,128)}', space=vmem, size = 0x12000, scoped, tag = 'internal scratch']
  #allocation2 [shape = 'f32[8,128]{1,0:T(8,128)}', space=vmem, size = 0x1000, scoped, tag = 'scratch operand']
  %s0 = inlined_call_operand.vmem [shape: f32[8,4], index: 0, kind: input, shape index: {}]
  %s1 = inlined_call_operand.vmem [shape: f32[1,32], index: 1, kind: input, shape index: {}]
  %s2 = inlined_call_operand.vmem [shape: f32[1,32], index: 2, kind: input, shape index: {}]
  %s3 = inlined_call_operand.hbm [shape: f32[8,128], index: 3, kind: output, shape index: {}]
  %s4 = sld [smem:[#allocation0]]
  $region22: #{tpu_custom_call.1} parent=0
    _
  %s6 = ssub.s32 1, %s4
  %s7 = scalar_select 0, %s6, %s4
  $region1: #{tpu_custom_call.1} parent=0
    #allocation3 [shape = 'u8[4096]{0}', space=vmem, size = 0x1000, scoped, tag = 'output window, operand 0, single buffered']
    #allocation4 [shape = 's32[1]{0}', space=sflag, size = 0x4, scoped, tag = 'scoped memory for tpu_custom_call.1']
    %8 = vsyncpa [#allocation4], 0
    // Predicated region
    $region2: #{tpu_custom_call.1} parent=1 // pred_check
      _
    $region3: #{tpu_custom_call.1} parent=1 // pred_check_branch
      %10 = sbr.rel (0) target = $region5
    $region4: #{tpu_custom_call.1} parent=1 // pred_region
      _
    $region5: #{tpu_custom_call.1} parent=1 // pred_fallthru
      _
    // Predicated region
    $region6: #{tpu_custom_call.1} parent=1 // pred_check
      _
    $region7: #{tpu_custom_call.1} parent=1 // pred_check_branch
      %12 = sbr.rel (0) target = $region9
    $region8: #{tpu_custom_call.1} parent=1 // pred_region
      _
    $region9: #{tpu_custom_call.1} parent=1 // pred_fallthru
      _
    // Predicated region
    $region10: #{tpu_custom_call.1} parent=1 // pred_check
      _
    $region11: #{tpu_custom_call.1} parent=1 // pred_check_branch
      %14 = sbr.rel (0) target = $region13
    $region12: #{tpu_custom_call.1} parent=1 // pred_region
      _
    $region13: #{tpu_custom_call.1} parent=1 // pred_fallthru
      _
    %v15 = vld [vmem:[%s0] sm:$0xff]
    %v16 = vld [vmem:[%s1] sm:$0x1]
    %v17 = vld [vmem:[%s2] sm:$0x1]
    %19 = vset.pattern.permute.xlu0 0
    %20 = vperm.xlu0 %19, %v15
    %v21 = vpop.permute.xlu0 %20
    %v24 = vlaneseq
    %v25 = vshrl.u32 %v24, 7
    %v26 = vsub.s32 0, %v25
    %v27 = vrot.slane %v16, %v26
    %v29 = vmul.f32 %v21, %v27
    %v31 = vlaneseq
    %v32 = vshrl.u32 %v31, 7
    %v33 = vsub.s32 0, %v32
    %v34 = vrot.slane %v17, %v33
    %v36 = vadd.f32 %v29, %v34
    %vm37 = vcmask 261120
    %38 = vst.msk [vmem:[#allocation2] sm:$0xff] %vm37, %v36
    %39 = vset.pattern.permute.xlu0 1
    %40 = vperm.xlu0 %39, %v15
    %v41 = vpop.permute.xlu0 %40
    %v43 = vmul.f32 %v41, %v27
    %v44 = vadd.f32 %v43, %v34
    %46 = vrot.lane.b32.xlu0 %v44, 32
    %v47 = vpop.permute.xlu0 %46
    %vm49 = vcmask 523520
    %50 = vst.msk [vmem:[#allocation2] sm:$0xff] %vm49, %v47
    %51 = vset.pattern.permute.xlu0 2
    %52 = vperm.xlu0 %51, %v15
    %v53 = vpop.permute.xlu0 %52
    %v55 = vmul.f32 %v53, %v27
    %v56 = vadd.f32 %v55, %v34
    %58 = vrot.lane.b32.xlu0 %v56, 64
    %v59 = vpop.permute.xlu0 %58
    %vm61 = vcmask 785920
    %62 = vst.msk [vmem:[#allocation2] sm:$0xff] %vm61, %v59
    %63 = vset.pattern.permute.xlu0 3
    %64 = vperm.xlu0 %63, %v15
    %v65 = vpop.permute.xlu0 %64
    %v67 = vmul.f32 %v65, %v27
    %v68 = vadd.f32 %v67, %v34
    %70 = vrot.lane.b32.xlu0 %v68, 96
    %v71 = vpop.permute.xlu0 %70
    %vm73 = vcmask 1048320
    %74 = vst.msk [vmem:[#allocation2] sm:$0xff] %vm73, %v71
    %v75 = vld [vmem:[#allocation2] sm:$0xff]
    %v76 = vand.u32 2147483647, %v75
    %vm77 = vcmp.le.f32.partialorder %v76, 0.7853982
    %vm78 = vcmp.lt.s32.totalorder %v75, 0
    %v79 = vand.u32 %v75, 2139095040
    %v80 = vshrl.u32 %v79, 23
    %v81 = vsub.s32 %v80, 127
    %v82 = vand.u32 2147483647, %v75
    %v83 = vand.u32 %v82, 8388607
    %v84 = vor.u32 %v83, 8388608
    %v85 = vsub.s32 0, %v84
    %v86 = vadd.s32 %v81, 1
    %vm87 = vcmp.gt.s32.totalorder %v86, 0
    %v88 = vsel %vm87, %v86, 0
    %v89 = vshrl.u32 %v88, 5
    %v90 = vand.u32 %v88, 31
    %v91 = vsub.s32 32, %v90
    %v92 = vshrl.u32 683565275, %v91
    %v93 = vshll.u32 683565275, %v90
    %v94 = vshrl.u32 2475754826, %v91
    %v95 = vor.u32 %v93, %v94
    %v96 = vshll.u32 2475754826, %v90
    %v97 = vshrl.u32 2131351028, %v91
    %v98 = vor.u32 %v96, %v97
    %v99 = vshll.u32 2131351028, %v90
    %v100 = vshrl.u32 2102212464, %v91
    %v101 = vor.u32 %v99, %v100
    %v102 = vshll.u32 2102212464, %v90
    %v103 = vshrl.u32 920167782, %v91
    %v104 = vor.u32 %v102, %v103
    %v105 = vshll.u32 920167782, %v90
    %v106 = vshrl.u32 1326507024, %v91
    %v107 = vor.u32 %v105, %v106
    %vm108 = vcmp.lt.s32.totalorder %v89, 1
    %vm109 = vcmp.lt.s32.totalorder %v89, 2
    %vm110 = vcmp.lt.s32.totalorder %v89, 3
    %vm111 = vcmp.lt.s32.totalorder %v89, 4
    %v112 = vsel %vm108, %v92, %v95
    %v113 = vsel %vm111, %v101, 2102212464
    %v114 = vsel %vm110, %v98, %v113
    %v115 = vsel %vm109, %v112, %v114
    %v116 = vsel %vm108, %v95, %v98
    %v117 = vsel %vm111, %v104, 920167782
    %v118 = vsel %vm110, %v101, %v117
    %v119 = vsel %vm109, %v116, %v118
    %v120 = vsel %vm108, %v98, %v101
    %v121 = vsel %vm111, %v107, 1326507024
    %v122 = vsel %vm110, %v104, %v121
    %v123 = vsel %vm109, %v120, %v122
    %v124 = vshll.u32 %v84, 8
    %v125 = vmul.u32.u64.compose %v124, %v123
    %v126 = vextract.low.u32 %v125
    %v127 = vextract.high.u32 %v125
    %v128 = vmul.u32.u64.compose %v124, %v119
    %v129 = vextract.low.u32 %v128
    %v130 = vextract.high.u32 %v128
    %v131 = vmul.u32 %v124, %v115
    %v132 = vadd.s32 %v127, %v129
    %vm133 = vc.u32 %v127, %v129
    %v134 = vadd.s32 %v130, 1
    %v135 = vsel %vm133, %v134, %v130
    %v136 = vadd.s32 %v131, %v135
    %v137 = vadd.s32 %v136, 536870912
    %v138 = vshrl.u32 %v137, 30
    %v139 = vshll.u32 %v138, 30
    %v140 = vsub.s32 %v136, %v139
    %vm141 = vcmp.lt.s32.totalorder %v140, 0
    %v142 = vsub.s32 0, %v140
    %v143 = vsel %vm141, %v142, %v140
    %v144 = vclz %v143
    %v145 = vsub.s32 %v144, 2
    %vm146 = vcmp.gt.s32.totalorder 0, %v145
    %v147 = vsel %vm146, 0, %v145
    %v148 = vsub.s32 32, %v147
    %v149 = vshll.u32 %v140, %v147
    %v150 = vshrl.u32 %v132, %v148
    %v151 = vor.u32 %v149, %v150
    %v152 = vsub.s32 4294967266, %v147
    %v153 = vadd.s32 %v152, 127
    %v154 = vshll.u32 %v153, 23
    %v155 = vor.u32 4788187, %v154
    %v156 = vand.u32 2147483647, %v155
    %v158 = vcvt.s32.f32 %v151
    %v159 = vmul.f32 %v158, %v156
    %v160 = vxor.u32 %v159, 2147483648
    %v161 = vsel %vm78, %v160, %v159
    %v162 = vsub.s32 4, %v138
    %v163 = vsel %vm78, %v162, %v138
    %v164 = vsel %vm77, %v75, %v161
    %v165 = vsel %vm77, 0, %v163
    %v166 = vcosq.f32.pop %v164
    %v167 = vsinq.f32.pop %v164
    %vm168 = vweird.f32 %v75
    %v169 = vadd.s32 %v165, 3
    %v170 = vand.u32 %v169, 3
    %vm171 = vcmp.lt.s32.totalorder %v170, 2
    %vm172 = vcmp.eq.s32.totalorder %v170, 0
    %v173 = vxor.u32 %v167, 2147483648
    %v174 = vsel %vm172, %v166, %v173
    %vm175 = vcmp.eq.s32.totalorder %v170, 2
    %v176 = vxor.u32 %v166, 2147483648
    %v177 = vsel %vm175, %v176, %v167
    %v178 = vsel %vm171, %v174, %v177
    %v179 = vsel %vm168, nan, %v178
    %180 = vst [vmem:[#allocation3] sm:$0xff] %v179
    // Predicated region
    $region14: #{tpu_custom_call.1} parent=1 // pred_check
      _
    $region15: #{tpu_custom_call.1} parent=1 // pred_check_branch
      %182 = sbr.rel (0) target = $region17
    $region16: #{tpu_custom_call.1} parent=1 // pred_region
      %s184 = ssub.s32 128, 128
      %185 = vsyncadd [#allocation4], %s184
      %s187 = sshll.u32 [#allocation3], 4
      %s188 = int_to_ptr.vmem [resolvable:$true] %s187
      %190 = dma.vmem_to_hbm [thread:$0]  %s188, 128, %s3, [#allocation4]
    $region17: #{tpu_custom_call.1} parent=1 // pred_fallthru
      _
    // Predicated region
    $region18: #{tpu_custom_call.1} parent=1 // pred_check
      _
    $region19: #{tpu_custom_call.1} parent=1 // pred_check_branch
      %192 = sbr.rel (0) target = $region21
    $region20: #{tpu_custom_call.1} parent=1 // pred_region
      %193 = dma.done [#allocation4], 128
    $region21: #{tpu_custom_call.1} parent=1 // pred_fallthru
      _
    %194 = vsyncpa [#allocation4], 1

</llo_original>
